<compile_context>
chip_gen: v7x
topology: tpu7x:2x2x1
jax: 0.10.0
libtpu: 0.0.40
codegen_flags: <defaults>
</compile_context>

<pallas_src>
import functools
import math

import jax
import jax.numpy as jnp
from jax import lax
from jax.experimental import pallas as pl
from jax.experimental.pallas import tpu as pltpu

LN_EPS = 1e-12                      # BERT layer_norm_eps default
_INV_SQRT2 = 1.0 / math.sqrt(2.0)


def _round_up(a, b):
    return (a + b - 1) // b * b


def _cdiv(a, b):
    return (a + b - 1) // b


def _vmem_capacity_bytes():
    """Best-effort physical-VMEM query; conservative (v7x, 64 MiB) fallback."""
    try:
        return int(pltpu.get_tpu_info().vmem_capacity_bytes)
    except Exception:
        return 64 * 1024 * 1024


# ---------------------------------------------------------------------------
# Fused kernel: transform (dense + GELU + LN) cached in VMEM, then decoder.
# ---------------------------------------------------------------------------
def _fused_mlm_kernel(x_ref, wt_ref, bt_ref, g_ref, beta_ref, wd_ref, bd_ref,
                      o_ref, y_ref, *, compute_dtype):
    # --- transform: only on the first vocab tile of each row tile ----------
    @pl.when(pl.program_id(1) == 0)
    def _():
        x = x_ref[...].astype(compute_dtype)                    # (tm, H) bf16
        h = jnp.dot(x, wt_ref[...],                             # bf16 MXU,
                    preferred_element_type=jnp.float32)         # f32 acc
        h = h + bt_ref[...].astype(jnp.float32)                 # (1, H) bcast
        # exact (erf-based) GELU, matching transformers' "gelu"
        h = 0.5 * h * (1.0 + lax.erf(h * _INV_SQRT2))
        # LayerNorm over the hidden (last) axis, f32 math
        mu = jnp.mean(h, axis=-1, keepdims=True)
        var = jnp.mean(jnp.square(h - mu), axis=-1, keepdims=True)
        y = (h - mu) * lax.rsqrt(var + LN_EPS)
        y = y * g_ref[...].astype(jnp.float32) + beta_ref[...].astype(jnp.float32)
        y_ref[...] = y.astype(y_ref.dtype)                      # cache in VMEM

    # --- decoder: logits tile = y @ W_dec_tile + bias_tile ------------------
    out = jnp.dot(y_ref[...], wd_ref[...],                      # bf16 MXU,
                  preferred_element_type=jnp.float32)           # f32 acc
    out = out + bd_ref[...].astype(jnp.float32)                 # (1, tv) bcast
    o_ref[...] = out.astype(o_ref.dtype)


# ---------------------------------------------------------------------------
# One-time parameter preparation (hoist out of the forward / training step)
# ---------------------------------------------------------------------------
def prepare_mlm_head_params(params, *, tv=None, matmul_dtype=jnp.bfloat16):
    """Casts weights to the MXU dtype, reshapes biases lane-dense, and pads the
    decoder weight/bias along vocab to a multiple of the vocab tile.  Call once
    (model load) and reuse the result for every forward call."""
    w_t = params["w_transform"]          # [H, H]  (stored [in, out])
    b_t = params["b_transform"]          # [H]
    gamma = params["ln_gamma"]           # [H]
    beta = params["ln_beta"]             # [H]
    w_dec = params["w_decoder"]          # [H, V]  (stored [in, out])
    b_dec = params["b_decoder"]          # [V]
    H, V = w_dec.shape

    if tv is None:
        # v5e/v6e (128 MiB physical VMEM): tv=4096 amortizes the ~0.35us/step
        # overhead and gives bigger weight-tile DMAs; v7x (64 MiB): tv=2048.
        tv = 4096 if _vmem_capacity_bytes() >= 96 * 1024 * 1024 else 2048
    tv = min(tv, _round_up(V, 128))
    V_pad = _round_up(V, tv)

    wd = w_dec.astype(matmul_dtype)
    bd = b_dec.astype(jnp.float32).reshape(1, V)
    if V_pad != V:
        wd = jnp.pad(wd, ((0, 0), (0, V_pad - V)))
        bd = jnp.pad(bd, ((0, 0), (0, V_pad - V)))

    return {
        "_prepped": True,
        "wt": w_t.astype(matmul_dtype),
        "bt": b_t.astype(jnp.float32).reshape(1, H),
        "gamma": gamma.astype(jnp.float32).reshape(1, H),
        "beta": beta.astype(jnp.float32).reshape(1, H),
        "wd": wd,
        "bd": bd,
        "H": int(H),
        "V": int(V),
        "V_pad": int(V_pad),
        "tv": int(tv),
        "matmul_dtype": matmul_dtype,
    }


# ---------------------------------------------------------------------------
# Forward wrapper
# ---------------------------------------------------------------------------
def mlm_head_forward(x, params, *, tm=512, out_dtype=jnp.float32,
                     vmem_limit_bytes=None):
    """x: [B, S, H].  Returns logits [B, S, V] in `out_dtype`.

    `params` may be raw (keys w_transform/b_transform/ln_gamma/ln_beta/
    w_decoder/b_decoder) or the output of prepare_mlm_head_params(); for best
    performance prepare once outside the training/inference step.
    Set out_dtype=jnp.bfloat16 to halve the logits writeback when the
    downstream softmax/CE can take bf16 (f32 accumulation is kept either way).
    """
    if not isinstance(params, dict) or not params.get("_prepped", False):
        params = prepare_mlm_head_params(params)   # hoist this for performance

    H = params["H"]
    V = params["V"]
    V_pad = params["V_pad"]
    tv = params["tv"]
    md = params["matmul_dtype"]

    B, S, H_in = x.shape
    assert H_in == H, (H_in, H)
    M = B * S

    # Row tile: multiple of 16 (bf16 sublane packing of the y scratch).  Keep
    # at least 2 row tiles when there is enough work so the "parallel" axis
    # feeds both v7x TensorCores.
    tm = max(16, min(tm, _round_up(M, 16)))
    if _cdiv(M, tm) < 2 and M > 32:
        tm = _round_up(_cdiv(M, 2), 16)
    M_pad = _round_up(M, tm)

    # bf16 activation stream: halves the x-tile DMA bytes and its VMEM
    # footprint; the kernel computes in bf16 on the MXU anyway.
    x2d = x.reshape(M, H).astype(md)
    if M_pad != M:
        x2d = jnp.pad(x2d, ((0, M_pad - M), (0, 0)))

    if vmem_limit_bytes is None:
        # 64 MiB scoped limit on 128 MiB parts (v5e/v6e); 48 MiB on v7x
        # (64 MiB physical) so double-buffered tiles keep comfortable headroom.
        big_vmem = _vmem_capacity_bytes() >= 96 * 1024 * 1024
        vmem_limit_bytes = (64 if big_vmem else 48) * 1024 * 1024

    kernel = functools.partial(_fused_mlm_kernel, compute_dtype=md)

    # NOTE: the constant-index inputs (wt/bt/gamma/beta) could be single-
    # buffered via pipeline_mode=pl.Buffered(1) to reclaim ~1-2 MiB of VMEM on
    # VMEM-tight configs; left at the default here.
    logits = pl.pallas_call(
        kernel,
        out_shape=jax.ShapeDtypeStruct((M_pad, V_pad), out_dtype),
        grid_spec=pltpu.PrefetchScalarGridSpec(
            num_scalar_prefetch=0,
            grid=(M_pad // tm, V_pad // tv),          # vocab axis innermost
            in_specs=[
                pl.BlockSpec((tm, H), lambda i, j: (i, 0)),   # x rows (bf16)
                pl.BlockSpec((H, H), lambda i, j: (0, 0)),    # transform weight
                pl.BlockSpec((1, H), lambda i, j: (0, 0)),    # transform bias
                pl.BlockSpec((1, H), lambda i, j: (0, 0)),    # LN gamma
                pl.BlockSpec((1, H), lambda i, j: (0, 0)),    # LN beta
                pl.BlockSpec((H, tv), lambda i, j: (0, j)),   # decoder weight
                pl.BlockSpec((1, tv), lambda i, j: (0, j)),   # decoder bias
            ],
            out_specs=pl.BlockSpec((tm, tv), lambda i, j: (i, j)),
            scratch_shapes=[pltpu.VMEM((tm, H), md)],         # cached y
        ),
        compiler_params=pltpu.CompilerParams(
            dimension_semantics=("parallel", "arbitrary"),
            vmem_limit_bytes=vmem_limit_bytes,
        ),
    )(x2d, params["wt"], params["bt"], params["gamma"], params["beta"],
      params["wd"], params["bd"])

    if M_pad != M or V_pad != V:
        logits = logits[:M, :V]
    return logits.reshape(B, S, V)


# ---------------------------------------------------------------------------
# Pure-JAX reference (matmul_dtype lets us match the kernel's cast points)
# ---------------------------------------------------------------------------
def mlm_head_ref(x, params, matmul_dtype=jnp.float32):
    md = matmul_dtype
    h = jnp.dot(x.astype(md), params["w_transform"].astype(md),
                preferred_element_type=jnp.float32)
    h = h + params["b_transform"]
    h = 0.5 * h * (1.0 + lax.erf(h * _INV_SQRT2))
    mu = jnp.mean(h, axis=-1, keepdims=True)
    var = jnp.mean(jnp.square(h - mu), axis=-1, keepdims=True)
    y = (h - mu) * lax.rsqrt(var + LN_EPS)
    y = y * params["ln_gamma"] + params["ln_beta"]
    logits = jnp.dot(y.astype(md), params["w_decoder"].astype(md),
                     preferred_element_type=jnp.float32)
    return logits + params["b_decoder"]


if __name__ == "__main__":
    # Small config consistent with the module: hidden_size=128, vocab_size=256
    B, S, H, V = 2, 8, 128, 256

    key = jax.random.PRNGKey(0)
    kx, kw1, kb1, kg, kbeta, kw2, kb2 = jax.random.split(key, 7)

    x = jax.random.normal(kx, (B, S, H), dtype=jnp.float32)

    params = {
        # dense (hidden -> hidden) of BertPredictionHeadTransform, stored [in, out]
        "w_transform": jax.random.normal(kw1, (H, H), dtype=jnp.float32) * (1.0 / math.sqrt(H)),
        "b_transform": jax.random.normal(kb1, (H,), dtype=jnp.float32) * 0.02,
        "ln_gamma":    1.0 + 0.02 * jax.random.normal(kg, (H,), dtype=jnp.float32),
        "ln_beta":     0.02 * jax.random.normal(kbeta, (H,), dtype=jnp.float32),
        # decoder Linear(hidden -> vocab, bias=False), stored [in, out]
        "w_decoder":   jax.random.normal(kw2, (H, V), dtype=jnp.float32) * (1.0 / math.sqrt(H)),
        # separate self.bias parameter (zeros in __init__; random here for a real test)
        "b_decoder":   0.02 * jax.random.normal(kb2, (V,), dtype=jnp.float32),
    }

    # One-time parameter prep (hoisted out of the forward path).
    prepped = prepare_mlm_head_params(params)
    prepped = jax.tree_util.tree_map(
        lambda a: jax.block_until_ready(a) if isinstance(a, jax.Array) else a,
        prepped)

    out = mlm_head_forward(x, prepped)
    out = jax.block_until_ready(out)
    assert out.shape == (B, S, V)

    # Tight check against a reference with the same bf16 cast points
    # (f32 accumulation in both).
    ref_bf16 = mlm_head_ref(x, params, matmul_dtype=jnp.bfloat16)
    err = float(jnp.max(jnp.abs(out - ref_bf16)))
    assert jnp.allclose(out, ref_bf16, atol=2e-3, rtol=2e-3), err

    # Loose sanity check against the full-f32 (PyTorch-equivalent) reference.
    ref_f32 = mlm_head_ref(x, params, matmul_dtype=jnp.float32)
    err32 = float(jnp.max(jnp.abs(out - ref_f32)))
    assert jnp.allclose(out, ref_f32, atol=1e-1, rtol=1e-1), err32

    print("KERNEL_OK")
</pallas_src>

<mosaic_0001>
module attributes {stable_mosaic.version = 11 : i64} {
  func.func @_fused_mlm_kernel(%arg0: i32, %arg1: i32, %arg2: memref<16x128xbf16, #tpu.memory_space<vmem>>, %arg3: memref<128x128xbf16, #tpu.memory_space<vmem>>, %arg4: memref<1x128xf32, #tpu.memory_space<vmem>>, %arg5: memref<1x128xf32, #tpu.memory_space<vmem>>, %arg6: memref<1x128xf32, #tpu.memory_space<vmem>>, %arg7: memref<128x256xbf16, #tpu.memory_space<vmem>>, %arg8: memref<1x256xf32, #tpu.memory_space<vmem>>, %arg9: memref<16x256xf32, #tpu.memory_space<vmem>>, %arg10: memref<16x128xbf16, #tpu.memory_space<vmem>>) attributes {dimension_semantics = [#tpu.dimension_semantics<parallel>, #tpu.dimension_semantics<arbitrary>], iteration_bounds = array<i64: 1, 1>, scalar_prefetch = 0 : i64, scratch_operands = 1 : i64, tpu.core_type = #tpu.core_type<tc>, window_params = [{transform_indices = @transform_0, window_bounds = array<i64: 16, 128>}, {pipeline_mode = #tpu.pipeline_mode<synchronous>, transform_indices = @transform_1, window_bounds = array<i64: 128, 128>}, {pipeline_mode = #tpu.pipeline_mode<synchronous>, transform_indices = @transform_2, window_bounds = array<i64: 1, 128>}, {pipeline_mode = #tpu.pipeline_mode<synchronous>, transform_indices = @transform_3, window_bounds = array<i64: 1, 128>}, {pipeline_mode = #tpu.pipeline_mode<synchronous>, transform_indices = @transform_4, window_bounds = array<i64: 1, 128>}, {transform_indices = @transform_5, window_bounds = array<i64: 128, 256>}, {transform_indices = @transform_6, window_bounds = array<i64: 1, 256>}, {transform_indices = @transform_7, window_bounds = array<i64: 16, 256>}]} {
    %c0_i32 = arith.constant 0 : i32
    %0 = arith.cmpi eq, %arg1, %c0_i32 : i32
    %1 = arith.extui %0 : i1 to i32
    %c0_i32_0 = arith.constant 0 : i32
    %2 = arith.cmpi ne, %1, %c0_i32_0 : i32
    scf.if %2 {
      %c0_8 = arith.constant 0 : index
      %c0_9 = arith.constant 0 : index
      %10 = vector.load %arg2[%c0_8, %c0_9] : memref<16x128xbf16, #tpu.memory_space<vmem>>, vector<16x128xbf16>
      %c0_10 = arith.constant 0 : index
      %c0_11 = arith.constant 0 : index
      %11 = vector.load %arg3[%c0_10, %c0_11] : memref<128x128xbf16, #tpu.memory_space<vmem>>, vector<128x128xbf16>
      %cst_12 = arith.constant dense<0.000000e+00> : vector<16x128xf32>
      %12 = tpu.matmul %10, %11, %cst_12 {dimension_numbers = #tpu.dot_dimension_numbers<[1], [0], [0], [1], [0, 0, 1, 1], [], []>} : vector<16x128xbf16>, vector<128x128xbf16>, vector<16x128xf32> -> vector<16x128xf32>
      %c0_13 = arith.constant 0 : index
      %c0_14 = arith.constant 0 : index
      %13 = vector.load %arg4[%c0_13, %c0_14] : memref<1x128xf32, #tpu.memory_space<vmem>>, vector<1x128xf32>
      %14 = vector.broadcast %13 : vector<1x128xf32> to vector<16x128xf32>
      %15 = arith.addf %12, %14 : vector<16x128xf32>
      %cst_15 = arith.constant 5.000000e-01 : f32
      %16 = vector.broadcast %cst_15 : f32 to vector<16x128xf32>
      %17 = arith.mulf %16, %15 : vector<16x128xf32>
      %cst_16 = arith.constant 0.707106769 : f32
      %18 = vector.broadcast %cst_16 : f32 to vector<16x128xf32>
      %19 = arith.mulf %15, %18 : vector<16x128xf32>
      %20 = math.erf %19 : vector<16x128xf32>
      %cst_17 = arith.constant 1.000000e+00 : f32
      %21 = vector.broadcast %cst_17 : f32 to vector<16x128xf32>
      %22 = arith.addf %21, %20 : vector<16x128xf32>
      %23 = arith.mulf %17, %22 : vector<16x128xf32>
      %cst_18 = arith.constant dense<0.000000e+00> : vector<16xf32>
      %24 = vector.multi_reduction <add>, %23, %cst_18 [1] : vector<16x128xf32> to vector<16xf32>
      %25 = vector.shape_cast %24 : vector<16xf32> to vector<16x1xf32>
      %cst_19 = arith.constant 1.280000e+02 : f32
      %26 = vector.broadcast %cst_19 : f32 to vector<16x1xf32>
      %27 = arith.divf %25, %26 : vector<16x1xf32>
      %28 = vector.broadcast %27 : vector<16x1xf32> to vector<16x128xf32>
      %29 = arith.subf %23, %28 : vector<16x128xf32>
      %30 = arith.mulf %29, %29 : vector<16x128xf32>
      %cst_20 = arith.constant dense<0.000000e+00> : vector<16xf32>
      %31 = vector.multi_reduction <add>, %30, %cst_20 [1] : vector<16x128xf32> to vector<16xf32>
      %32 = vector.shape_cast %31 : vector<16xf32> to vector<16x1xf32>
      %cst_21 = arith.constant 1.280000e+02 : f32
      %33 = vector.broadcast %cst_21 : f32 to vector<16x1xf32>
      %34 = arith.divf %32, %33 : vector<16x1xf32>
      %35 = vector.broadcast %27 : vector<16x1xf32> to vector<16x128xf32>
      %36 = arith.subf %23, %35 : vector<16x128xf32>
      %cst_22 = arith.constant 9.99999996E-13 : f32
      %37 = vector.broadcast %cst_22 : f32 to vector<16x1xf32>
      %38 = arith.addf %34, %37 : vector<16x1xf32>
      %39 = math.rsqrt %38 : vector<16x1xf32>
      %40 = vector.broadcast %39 : vector<16x1xf32> to vector<16x128xf32>
      %41 = arith.mulf %36, %40 : vector<16x128xf32>
      %c0_23 = arith.constant 0 : index
      %c0_24 = arith.constant 0 : index
      %42 = vector.load %arg5[%c0_23, %c0_24] : memref<1x128xf32, #tpu.memory_space<vmem>>, vector<1x128xf32>
      %43 = vector.broadcast %42 : vector<1x128xf32> to vector<16x128xf32>
      %44 = arith.mulf %41, %43 : vector<16x128xf32>
      %c0_25 = arith.constant 0 : index
      %c0_26 = arith.constant 0 : index
      %45 = vector.load %arg6[%c0_25, %c0_26] : memref<1x128xf32, #tpu.memory_space<vmem>>, vector<1x128xf32>
      %46 = vector.broadcast %45 : vector<1x128xf32> to vector<16x128xf32>
      %47 = arith.addf %44, %46 : vector<16x128xf32>
      %48 = arith.truncf %47 : vector<16x128xf32> to vector<16x128xbf16>
      %c0_27 = arith.constant 0 : index
      %c0_28 = arith.constant 0 : index
      %49 = vector.load %arg10[%c0_27, %c0_28] : memref<16x128xbf16, #tpu.memory_space<vmem>>, vector<16x128xbf16>
      tpu.vector_store %arg10[%c0_27, %c0_28], %48 {strides = array<i32>} : memref<16x128xbf16, #tpu.memory_space<vmem>>, vector<16x128xbf16>,
    } else {
    }
    %c0 = arith.constant 0 : index
    %c0_1 = arith.constant 0 : index
    %3 = vector.load %arg10[%c0, %c0_1] : memref<16x128xbf16, #tpu.memory_space<vmem>>, vector<16x128xbf16>
    %c0_2 = arith.constant 0 : index
    %c0_3 = arith.constant 0 : index
    %4 = vector.load %arg7[%c0_2, %c0_3] : memref<128x256xbf16, #tpu.memory_space<vmem>>, vector<128x256xbf16>
    %cst = arith.constant dense<0.000000e+00> : vector<16x256xf32>
    %5 = tpu.matmul %3, %4, %cst {dimension_numbers = #tpu.dot_dimension_numbers<[1], [0], [0], [1], [0, 0, 1, 1], [], []>} : vector<16x128xbf16>, vector<128x256xbf16>, vector<16x256xf32> -> vector<16x256xf32>
    %c0_4 = arith.constant 0 : index
    %c0_5 = arith.constant 0 : index
    %6 = vector.load %arg8[%c0_4, %c0_5] : memref<1x256xf32, #tpu.memory_space<vmem>>, vector<1x256xf32>
    %7 = vector.broadcast %6 : vector<1x256xf32> to vector<16x256xf32>
    %8 = arith.addf %5, %7 : vector<16x256xf32>
    %c0_6 = arith.constant 0 : index
    %c0_7 = arith.constant 0 : index
    %9 = vector.load %arg9[%c0_6, %c0_7] : memref<16x256xf32, #tpu.memory_space<vmem>>, vector<16x256xf32>
    tpu.vector_store %arg9[%c0_6, %c0_7], %8 {strides = array<i32>} : memref<16x256xf32, #tpu.memory_space<vmem>>, vector<16x256xf32>,
    return
  }
  func.func @transform_0(%arg0: i32, %arg1: i32) -> (i32, i32) {
    %c0_i32 = arith.constant 0 : i32
    %c0_i32_0 = arith.constant 0 : i32
    return %arg0, %c0_i32 : i32, i32
  }
  func.func @transform_1(%arg0: i32, %arg1: i32) -> (i32, i32) {
    %c0_i32 = arith.constant 0 : i32
    %c0_i32_0 = arith.constant 0 : i32
    %c0_i32_1 = arith.constant 0 : i32
    return %c0_i32, %c0_i32_0 : i32, i32
  }
  func.func @transform_2(%arg0: i32, %arg1: i32) -> (i32, i32) {
    %c0_i32 = arith.constant 0 : i32
    %c0_i32_0 = arith.constant 0 : i32
    %c0_i32_1 = arith.constant 0 : i32
    return %c0_i32, %c0_i32_0 : i32, i32
  }
  func.func @transform_3(%arg0: i32, %arg1: i32) -> (i32, i32) {
    %c0_i32 = arith.constant 0 : i32
    %c0_i32_0 = arith.constant 0 : i32
    %c0_i32_1 = arith.constant 0 : i32
    return %c0_i32, %c0_i32_0 : i32, i32
  }
  func.func @transform_4(%arg0: i32, %arg1: i32) -> (i32, i32) {
    %c0_i32 = arith.constant 0 : i32
    %c0_i32_0 = arith.constant 0 : i32
    %c0_i32_1 = arith.constant 0 : i32
    return %c0_i32, %c0_i32_0 : i32, i32
  }
  func.func @transform_5(%arg0: i32, %arg1: i32) -> (i32, i32) {
    %c0_i32 = arith.constant 0 : i32
    %c0_i32_0 = arith.constant 0 : i32
    return %c0_i32, %arg1 : i32, i32
  }
  func.func @transform_6(%arg0: i32, %arg1: i32) -> (i32, i32) {
    %c0_i32 = arith.constant 0 : i32
    %c0_i32_0 = arith.constant 0 : i32
    return %c0_i32, %arg1 : i32, i32
  }
  func.func @transform_7(%arg0: i32, %arg1: i32) -> (i32, i32) {
    %c0_i32 = arith.constant 0 : i32
    return %arg0, %arg1 : i32, i32
  }
}

</mosaic_0001>

<llo_original>
// kernel: tpu_custom_call.1
$region0: #{tpu_custom_call.1}
  #allocation0 [shape = 'u32[]', space=smem, size = 0x4, offset = 0x4, fixed_abs, tag = 'smem constant byte address 0x4 - core index']
  #allocation1 [shape = 'u32[144,128]{1,0:T(1,128)}', space=vmem, size = 0x12000, scoped, tag = 'internal scratch']
  #allocation2 [shape = 'bf16[16,128]{1,0:T(16,128)(2,1)}', space=vmem, size = 0x1000, scoped, tag = 'scratch operand']
  %s0 = inlined_call_operand.hbm [shape: bf16[16,128], index: 0, kind: input, shape index: {}]
  %s1 = inlined_call_operand.hbm [shape: bf16[128,128], index: 1, kind: input, shape index: {}]
  %s2 = inlined_call_operand.vmem [shape: f32[1,128], index: 2, kind: input, shape index: {}]
  %s3 = inlined_call_operand.vmem [shape: f32[1,128], index: 3, kind: input, shape index: {}]
  %s4 = inlined_call_operand.vmem [shape: f32[1,128], index: 4, kind: input, shape index: {}]
  %s5 = inlined_call_operand.hbm [shape: bf16[128,256], index: 5, kind: input, shape index: {}]
  %s6 = inlined_call_operand.vmem [shape: f32[1,256], index: 6, kind: input, shape index: {}]
  %s7 = inlined_call_operand.hbm [shape: f32[16,256], index: 7, kind: output, shape index: {}]
  %s8 = sld [smem:[#allocation0]]
  $region54: #{tpu_custom_call.1} parent=0
    _
  %s10 = ssub.s32 1, %s8
  %s11 = scalar_select 0, %s10, %s8
  $region1: #{tpu_custom_call.1} parent=0
    #allocation3 [shape = 'u8[4096]{0}', space=vmem, size = 0x1000, scoped, tag = 'input window, operand 0, single buffered']
    #allocation4 [shape = 's32[1]{0}', space=sflag, size = 0x4, scoped, tag = 'scoped memory for tpu_custom_call.1']
    #allocation5 [shape = 's32[1]{0}', space=sflag, size = 0x4, scoped, tag = 'scoped memory for tpu_custom_call.1']
    #allocation6 [shape = 'u8[32768]{0}', space=vmem, size = 0x8000, scoped, tag = 'input window, operand 1, single buffered']
    #allocation7 [shape = 's32[1]{0}', space=sflag, size = 0x4, scoped, tag = 'scoped memory for tpu_custom_call.1']
    #allocation8 [shape = 'u8[65536]{0}', space=vmem, size = 0x10000, scoped, tag = 'input window, operand 5, single buffered']
    #allocation9 [shape = 'u8[16384]{0}', space=vmem, size = 0x4000, scoped, tag = 'output window, operand 0, single buffered']
    %12 = vsyncpa [#allocation4], 0
    %13 = vsyncpa [#allocation7], 0
    %14 = vsyncpa [#allocation5], 0
    // Predicated region
    $region2: #{tpu_custom_call.1} parent=1 // pred_check
      _
    $region3: #{tpu_custom_call.1} parent=1 // pred_check_branch
      %16 = sbr.rel (0) target = $region5
    $region4: #{tpu_custom_call.1} parent=1 // pred_region
      %s18 = ssub.s32 128, 128
      %19 = vsyncadd [#allocation4], %s18
      %s20 = sshll.u32 [#allocation3], 4
      %s21 = int_to_ptr.vmem [resolvable:$true] %s20
      %26 = dma.hbm_to_vmem [thread:$0]  %s0, 128, %s21, [#allocation4], 64, 64, 4
    $region5: #{tpu_custom_call.1} parent=1 // pred_fallthru
      _
    // Predicated region
    $region6: #{tpu_custom_call.1} parent=1 // pred_check
      _
    $region7: #{tpu_custom_call.1} parent=1 // pred_check_branch
      %28 = sbr.rel (0) target = $region9
    $region8: #{tpu_custom_call.1} parent=1 // pred_region
      %s30 = ssub.s32 1024, 1024
      %31 = vsyncadd [#allocation7], %s30
      %s32 = sshll.u32 [#allocation6], 4
      %s33 = int_to_ptr.vmem [resolvable:$true] %s32
      %38 = dma.hbm_to_vmem [thread:$0]  %s1, 1024, %s33, [#allocation7], 64, 64, 4
    $region9: #{tpu_custom_call.1} parent=1 // pred_fallthru
      _
    // Predicated region
    $region10: #{tpu_custom_call.1} parent=1 // pred_check
      _
    $region11: #{tpu_custom_call.1} parent=1 // pred_check_branch
      %40 = sbr.rel (0) target = $region13
    $region12: #{tpu_custom_call.1} parent=1 // pred_region
      _
    $region13: #{tpu_custom_call.1} parent=1 // pred_fallthru
      _
    // Predicated region
    $region14: #{tpu_custom_call.1} parent=1 // pred_check
      _
    $region15: #{tpu_custom_call.1} parent=1 // pred_check_branch
      %42 = sbr.rel (0) target = $region17
    $region16: #{tpu_custom_call.1} parent=1 // pred_region
      _
    $region17: #{tpu_custom_call.1} parent=1 // pred_fallthru
      _
    // Predicated region
    $region18: #{tpu_custom_call.1} parent=1 // pred_check
      _
    $region19: #{tpu_custom_call.1} parent=1 // pred_check_branch
      %44 = sbr.rel (0) target = $region21
    $region20: #{tpu_custom_call.1} parent=1 // pred_region
      _
    $region21: #{tpu_custom_call.1} parent=1 // pred_fallthru
      _
    // Predicated region
    $region22: #{tpu_custom_call.1} parent=1 // pred_check
      _
    $region23: #{tpu_custom_call.1} parent=1 // pred_check_branch
      %46 = sbr.rel (0) target = $region25
    $region24: #{tpu_custom_call.1} parent=1 // pred_region
      %s48 = ssub.s32 2048, 2048
      %49 = vsyncadd [#allocation7], %s48
      %s50 = sshll.u32 [#allocation8], 4
      %s51 = int_to_ptr.vmem [resolvable:$true] %s50
      %56 = dma.hbm_to_vmem [thread:$0]  %s5, 2048, %s51, [#allocation7], 128, 128, 8
    $region25: #{tpu_custom_call.1} parent=1 // pred_fallthru
      _
    // Predicated region
    $region26: #{tpu_custom_call.1} parent=1 // pred_check
      _
    $region27: #{tpu_custom_call.1} parent=1 // pred_check_branch
      %58 = sbr.rel (0) target = $region29
    $region28: #{tpu_custom_call.1} parent=1 // pred_region
      _
    $region29: #{tpu_custom_call.1} parent=1 // pred_fallthru
      _
    // Predicated region
    $region30: #{tpu_custom_call.1} parent=1 // pred_check
      _
    $region31: #{tpu_custom_call.1} parent=1 // pred_check_branch
      %60 = sbr.rel (0) target = $region33
    $region32: #{tpu_custom_call.1} parent=1 // pred_region
      %61 = dma.done [#allocation4], 128
    $region33: #{tpu_custom_call.1} parent=1 // pred_fallthru
      _
    // Predicated region
    $region34: #{tpu_custom_call.1} parent=1 // pred_check
      _
    $region35: #{tpu_custom_call.1} parent=1 // pred_check_branch
      %63 = sbr.rel (0) target = $region37
    $region36: #{tpu_custom_call.1} parent=1 // pred_region
      %64 = dma.done [#allocation7], 1024
    $region37: #{tpu_custom_call.1} parent=1 // pred_fallthru
      _
    // Predicated region
    $region38: #{tpu_custom_call.1} parent=1 // pred_check
      _
    $region39: #{tpu_custom_call.1} parent=1 // pred_check_branch
      %66 = sbr.rel (0) target = $region41
    $region40: #{tpu_custom_call.1} parent=1 // pred_region
      %67 = dma.done [#allocation7], 2048
    $region41: #{tpu_custom_call.1} parent=1 // pred_fallthru
      _
    %p69 = scmp.eq.s32.totalorder 0, 0
    // Predicated region
    $region42: #{tpu_custom_call.1} parent=1 // pred_check
      %p70 = pneg %p69
    $region43: #{tpu_custom_call.1} parent=1 // pred_check_branch
      %72 = sbr.rel (%p70) target = $region45
    $region44: #{tpu_custom_call.1} parent=1 // pred_region
      %v73 = vld [vmem:[#allocation3] sm:$0xf]
      %v74 = vld [vmem:[#allocation3 + $0x4] sm:$0xf]
      %v75 = vld [vmem:[#allocation6] sm:$0xf]
      %v76 = vld [vmem:[#allocation6 + $0x4] sm:$0xf]
      %v77 = vld [vmem:[#allocation6 + $0x8] sm:$0xf]
      %v78 = vld [vmem:[#allocation6 + $0xc] sm:$0xf]
      %v79 = vld [vmem:[#allocation6 + $0x10] sm:$0xf]
      %v80 = vld [vmem:[#allocation6 + $0x14] sm:$0xf]
      %v81 = vld [vmem:[#allocation6 + $0x18] sm:$0xf]
      %v82 = vld [vmem:[#allocation6 + $0x1c] sm:$0xf]
      %v83 = vld [vmem:[#allocation6 + $0x20] sm:$0xf]
      %v84 = vld [vmem:[#allocation6 + $0x24] sm:$0xf]
      %v85 = vld [vmem:[#allocation6 + $0x28] sm:$0xf]
      %v86 = vld [vmem:[#allocation6 + $0x2c] sm:$0xf]
      %v87 = vld [vmem:[#allocation6 + $0x30] sm:$0xf]
      %v88 = vld [vmem:[#allocation6 + $0x34] sm:$0xf]
      %v89 = vld [vmem:[#allocation6 + $0x38] sm:$0xf]
      %v90 = vld [vmem:[#allocation6 + $0x3c] sm:$0xf]
      %v91 = vld [vmem:[%s2] sm:$0x1]
      %v93 = vlaneseq
      %v94 = vshrl.u32 %v93, 7
      %v95 = vsub.s32 0, %v94
      %v96 = vrot.slane %v91, %v95
      %v100 = vunpack.c.l.b16 %v73
      %v101 = vunpack.c.l.b16 %v74
      %v102 = vpack.c.b16 %v101, %v100
      %v120 = vunpack.c.l.b16 %v75
      %v121 = vunpack.c.l.b16 %v76
      %v122 = vunpack.c.l.b16 %v77
      %v123 = vunpack.c.l.b16 %v78
      %v124 = vunpack.c.l.b16 %v79
      %v125 = vunpack.c.l.b16 %v80
      %v126 = vunpack.c.l.b16 %v81
      %v127 = vunpack.c.l.b16 %v82
      %v128 = vunpack.c.l.b16 %v83
      %v129 = vunpack.c.l.b16 %v84
      %v130 = vunpack.c.l.b16 %v85
      %v131 = vunpack.c.l.b16 %v86
      %v132 = vunpack.c.l.b16 %v87
      %v133 = vunpack.c.l.b16 %v88
      %v134 = vunpack.c.l.b16 %v89
      %v135 = vunpack.c.l.b16 %v90
      %v136 = vpack.c.b16 %v121, %v120
      %v137 = vpack.c.b16 %v123, %v122
      %v138 = vpack.c.b16 %v125, %v124
      %v139 = vpack.c.b16 %v127, %v126
      %v140 = vpack.c.b16 %v129, %v128
      %v141 = vpack.c.b16 %v131, %v130
      %v142 = vpack.c.b16 %v133, %v132
      %v143 = vpack.c.b16 %v135, %v134
      %152 = vmatprep.subr.bf16.mxu0 0
      %153 = vmatpush1.bf16.msra.mxu0 %v136
      %154 = vmatprep.subr.bf16.mxu0 0
      %155 = vmatpush1.bf16.msra.mxu0 %v137
      %156 = vmatprep.subr.bf16.mxu0 0
      %157 = vmatpush1.bf16.msra.mxu0 %v138
      %158 = vmatprep.subr.bf16.mxu0 0
      %159 = vmatpush1.bf16.msra.mxu0 %v139
      %160 = vmatprep.subr.bf16.mxu0 0
      %161 = vmatpush1.bf16.msra.mxu0 %v140
      %162 = vmatprep.subr.bf16.mxu0 0
      %163 = vmatpush1.bf16.msra.mxu0 %v141
      %164 = vmatprep.subr.bf16.mxu0 0
      %165 = vmatpush1.bf16.msra.mxu0 %v142
      %166 = vmatprep.subr.bf16.mxu0 0
      %167 = vmatpush1.bf16.msra.mxu0 %v143
      %168 = vmatprep.subr.bf16.mxu0 0
      %169 = vmatpush1.bf16.msra.mxu0 0
      %170 = vmatprep.subr.bf16.mxu0 0
      %171 = vmatpush1.bf16.msra.mxu0 0
      %172 = vmatprep.subr.bf16.mxu0 0
      %173 = vmatpush1.bf16.msra.mxu0 0
      %174 = vmatprep.subr.bf16.mxu0 0
      %175 = vmatpush1.bf16.msra.mxu0 0
      %176 = vmatprep.subr.bf16.mxu0 0
      %177 = vmatpush1.bf16.msra.mxu0 0
      %178 = vmatprep.subr.bf16.mxu0 0
      %179 = vmatpush1.bf16.msra.mxu0 0
      %180 = vmatprep.subr.bf16.mxu0 0
      %181 = vmatpush1.bf16.msra.mxu0 0
      %182 = vmatprep.subr.bf16.mxu0 0
      %183 = vmatpush1.bf16.msra.mxu0 0
      %184 = vmatprep.mubr.bf16.mxu0 0
      %185 = vmatmul.mubr.bf16.gmra.mrb[0].mxu0 %v102
      %v186 = vpop.f32.mrb[0].mxu0
      %v187 = vadd.f32 %v96, %v186
      %v188 = vpop.f32.mrb[0].mxu0
      %v189 = vpop.f32.mrb[0].mxu0
      %v190 = vadd.f32 %v96, %v189
      %v191 = vpop.f32.mrb[0].mxu0
      %192 = vdwg.mxu0
      %v193 = vmul.f32 %v187, 0.5
      %v194 = vmul.f32 %v190, 0.5
      %v195 = vmul.f32 %v187, 0.70710677
      %v196 = vmul.f32 %v190, 0.70710677
      %v197 = verf.f32.pop %v195
      %v198 = verf.f32.pop %v196
      %v199 = vadd.f32 %v197, 1.0
      %v200 = vadd.f32 %v198, 1.0
      %v201 = vmul.f32 %v193, %v199
      %v202 = vmul.f32 %v194, %v200
      %203 = vadd.xlane.f32.xlu0 %v201
      %v204 = vpop.xlane.xlu0 %203
      %205 = vadd.xlane.f32.xlu0 %v202
      %v206 = vpop.xlane.xlu0 %205
      %v207 = vrcp.pop 128.0
      %v208 = vmul.f32 %v204, %v207
      %v209 = vmul.f32 %v206, %v207
      %v210 = vsub.f32 %v201, %v208
      %v211 = vsub.f32 %v202, %v209
      %v212 = vmul.f32 %v210, %v210
      %v213 = vmul.f32 %v211, %v211
      %214 = vadd.xlane.f32.xlu0 %v212
      %v215 = vpop.xlane.xlu0 %214
      %216 = vadd.xlane.f32.xlu0 %v213
      %v217 = vpop.xlane.xlu0 %216
      %v218 = vmul.f32 %v215, %v207
      %v219 = vmul.f32 %v217, %v207
      %v220 = vadd.f32 %v218, 1e-12
      %v221 = vadd.f32 %v219, 1e-12
      %v222 = vrsqrt.pop %v220
      %v223 = vrsqrt.pop %v221
      %v224 = vmul.f32 %v210, %v222
      %v225 = vmul.f32 %v211, %v223
      %v226 = vld [vmem:[%s3] sm:$0x1]
      %v228 = vlaneseq
      %v229 = vshrl.u32 %v228, 7
      %v230 = vsub.s32 0, %v229
      %v231 = vrot.slane %v226, %v230
      %v233 = vmul.f32 %v224, %v231
      %v234 = vmul.f32 %v225, %v231
      %v235 = vld [vmem:[%s4] sm:$0x1]
      %v237 = vlaneseq
      %v238 = vshrl.u32 %v237, 7
      %v239 = vsub.s32 0, %v238
      %v240 = vrot.slane %v235, %v239
      %v242 = vadd.f32 %v233, %v240
      %v243 = vadd.f32 %v234, %v240
      %v244 = vpack.c.bf16 %v243, %v242
      %245 = vst [vmem:[#allocation2] sm:$0xff] %v244
    $region45: #{tpu_custom_call.1} parent=1 // pred_fallthru
      _
    %v246 = vld [vmem:[#allocation2] sm:$0xff]
    %v247 = vld [vmem:[#allocation8] sm:$0xff]
    %v248 = vld [vmem:[#allocation8 + $0x8] sm:$0xff]
    %v249 = vld [vmem:[#allocation8 + $0x10] sm:$0xff]
    %v250 = vld [vmem:[#allocation8 + $0x18] sm:$0xff]
    %v251 = vld [vmem:[#allocation8 + $0x20] sm:$0xff]
    %v252 = vld [vmem:[#allocation8 + $0x28] sm:$0xff]
    %v253 = vld [vmem:[#allocation8 + $0x30] sm:$0xff]
    %v254 = vld [vmem:[#allocation8 + $0x38] sm:$0xff]
    %v255 = vld [vmem:[#allocation8 + $0x40] sm:$0xff]
    %v256 = vld [vmem:[#allocation8 + $0x48] sm:$0xff]
    %v257 = vld [vmem:[#allocation8 + $0x50] sm:$0xff]
    %v258 = vld [vmem:[#allocation8 + $0x58] sm:$0xff]
    %v259 = vld [vmem:[#allocation8 + $0x60] sm:$0xff]
    %v260 = vld [vmem:[#allocation8 + $0x68] sm:$0xff]
    %v261 = vld [vmem:[#allocation8 + $0x70] sm:$0xff]
    %v262 = vld [vmem:[#allocation8 + $0x78] sm:$0xff]
    %v263 = vld [vmem:[%s6] sm:$0x3]
    %v265 = vlaneseq
    %v266 = vshrl.u32 %v265, 7
    %v267 = vsub.s32 0, %v266
    %v268 = vrot.slane %v263, %v267
    %v269 = vlaneseq
    %v270 = vshrl.u32 %v269, 7
    %v271 = vsub.s32 1, %v270
    %v272 = vrot.slane %v263, %v271
    %v291 = vunpack.c.l.b16 %v247
    %v292 = vunpack.c.h.b16 %v247
    %v293 = vunpack.c.l.b16 %v248
    %v294 = vunpack.c.h.b16 %v248
    %v295 = vunpack.c.l.b16 %v249
    %v296 = vunpack.c.h.b16 %v249
    %v297 = vunpack.c.l.b16 %v250
    %v298 = vunpack.c.h.b16 %v250
    %v299 = vunpack.c.l.b16 %v251
    %v300 = vunpack.c.h.b16 %v251
    %v301 = vunpack.c.l.b16 %v252
    %v302 = vunpack.c.h.b16 %v252
    %v303 = vunpack.c.l.b16 %v253
    %v304 = vunpack.c.h.b16 %v253
    %v305 = vunpack.c.l.b16 %v254
    %v306 = vunpack.c.h.b16 %v254
    %v307 = vunpack.c.l.b16 %v255
    %v308 = vunpack.c.h.b16 %v255
    %v309 = vunpack.c.l.b16 %v256
    %v310 = vunpack.c.h.b16 %v256
    %v311 = vunpack.c.l.b16 %v257
    %v312 = vunpack.c.h.b16 %v257
    %v313 = vunpack.c.l.b16 %v258
    %v314 = vunpack.c.h.b16 %v258
    %v315 = vunpack.c.l.b16 %v259
    %v316 = vunpack.c.h.b16 %v259
    %v317 = vunpack.c.l.b16 %v260
    %v318 = vunpack.c.h.b16 %v260
    %v319 = vunpack.c.l.b16 %v261
    %v320 = vunpack.c.h.b16 %v261
    %v321 = vunpack.c.l.b16 %v262
    %v322 = vunpack.c.h.b16 %v262
    %v323 = vpack.c.b16 %v293, %v291
    %v324 = vpack.c.b16 %v294, %v292
    %v325 = vpack.c.b16 %v297, %v295
    %v326 = vpack.c.b16 %v298, %v296
    %v327 = vpack.c.b16 %v301, %v299
    %v328 = vpack.c.b16 %v302, %v300
    %v329 = vpack.c.b16 %v305, %v303
    %v330 = vpack.c.b16 %v306, %v304
    %v331 = vpack.c.b16 %v309, %v307
    %v332 = vpack.c.b16 %v310, %v308
    %v333 = vpack.c.b16 %v313, %v311
    %v334 = vpack.c.b16 %v314, %v312
    %v335 = vpack.c.b16 %v317, %v315
    %v336 = vpack.c.b16 %v318, %v316
    %v337 = vpack.c.b16 %v321, %v319
    %v338 = vpack.c.b16 %v322, %v320
    %355 = vmatprep.subr.bf16.mxu0 %v324
    %356 = vmatpush1.bf16.msra.mxu0 %v323
    %357 = vmatprep.subr.bf16.mxu0 %v326
    %358 = vmatpush1.bf16.msra.mxu0 %v325
    %359 = vmatprep.subr.bf16.mxu0 %v328
    %360 = vmatpush1.bf16.msra.mxu0 %v327
    %361 = vmatprep.subr.bf16.mxu0 %v330
    %362 = vmatpush1.bf16.msra.mxu0 %v329
    %363 = vmatprep.subr.bf16.mxu0 %v332
    %364 = vmatpush1.bf16.msra.mxu0 %v331
    %365 = vmatprep.subr.bf16.mxu0 %v334
    %366 = vmatpush1.bf16.msra.mxu0 %v333
    %367 = vmatprep.subr.bf16.mxu0 %v336
    %368 = vmatpush1.bf16.msra.mxu0 %v335
    %369 = vmatprep.subr.bf16.mxu0 %v338
    %370 = vmatpush1.bf16.msra.mxu0 %v337
    %371 = vmatprep.subr.bf16.mxu0 0
    %372 = vmatpush1.bf16.msra.mxu0 0
    %373 = vmatprep.subr.bf16.mxu0 0
    %374 = vmatpush1.bf16.msra.mxu0 0
    %375 = vmatprep.subr.bf16.mxu0 0
    %376 = vmatpush1.bf16.msra.mxu0 0
    %377 = vmatprep.subr.bf16.mxu0 0
    %378 = vmatpush1.bf16.msra.mxu0 0
    %379 = vmatprep.subr.bf16.mxu0 0
    %380 = vmatpush1.bf16.msra.mxu0 0
    %381 = vmatprep.subr.bf16.mxu0 0
    %382 = vmatpush1.bf16.msra.mxu0 0
    %383 = vmatprep.subr.bf16.mxu0 0
    %384 = vmatpush1.bf16.msra.mxu0 0
    %385 = vmatprep.subr.bf16.mxu0 0
    %386 = vmatpush1.bf16.msra.mxu0 0
    %387 = vmatprep.mubr.bf16.mxu0 0
    %388 = vmatmul.mubr.bf16.gmra.mrb[0].mxu0 %v246
    %v389 = vpop.f32.mrb[0].mxu0
    %v390 = vadd.f32 %v268, %v389
    %v391 = vpop.f32.mrb[0].mxu0
    %v392 = vadd.f32 %v272, %v391
    %v393 = vpop.f32.mrb[0].mxu0
    %v394 = vadd.f32 %v268, %v393
    %v395 = vpop.f32.mrb[0].mxu0
    %v396 = vadd.f32 %v272, %v395
    %397 = vdwg.mxu0
    %398 = vst [vmem:[#allocation9] sm:$0xff] %v390
    %399 = vst [vmem:[#allocation9 + $0x8] sm:$0xff] %v392
    %400 = vst [vmem:[#allocation9 + $0x10] sm:$0xff] %v394
    %401 = vst [vmem:[#allocation9 + $0x18] sm:$0xff] %v396
    // Predicated region
    $region46: #{tpu_custom_call.1} parent=1 // pred_check
      _
    $region47: #{tpu_custom_call.1} parent=1 // pred_check_branch
      %403 = sbr.rel (0) target = $region49
    $region48: #{tpu_custom_call.1} parent=1 // pred_region
      %s405 = ssub.s32 512, 512
      %406 = vsyncadd [#allocation5], %s405
      %s407 = sshll.u32 [#allocation9], 4
      %s408 = int_to_ptr.vmem [resolvable:$true] %s407
      %413 = dma.vmem_to_hbm [thread:$0]  %s408, 512, %s7, [#allocation5], 256, 256, 16
    $region49: #{tpu_custom_call.1} parent=1 // pred_fallthru
      _
    // Predicated region
    $region50: #{tpu_custom_call.1} parent=1 // pred_check
      _
    $region51: #{tpu_custom_call.1} parent=1 // pred_check_branch
      %415 = sbr.rel (0) target = $region53
    $region52: #{tpu_custom_call.1} parent=1 // pred_region
      %416 = dma.done [#allocation5], 512
    $region53: #{tpu_custom_call.1} parent=1 // pred_fallthru
      _
    %417 = vsyncpa [#allocation4], 1
    %418 = vsyncpa [#allocation7], 1
    %419 = vsyncpa [#allocation5], 1

</llo_original>
